<compile_context>
chip_gen: v5e
topology: v5e:2x2
jax: 0.10.0
libtpu: 0.0.40
codegen_flags: <defaults>
</compile_context>

<pallas_src>
import functools

import jax
import jax.numpy as jnp
from jax import lax
from jax.experimental import pallas as pl
from jax.experimental.pallas import tpu as pltpu


def _yolo_kernel(anchors_ref, x_ref, o_ref, stage_ref, *, stride, nx, hw_chunk):
    """One (batch, anchor, hw-chunk) block of YOLO head post-processing.

    anchors_ref: (2, 1) f32 VMEM     -- (anchor_w, anchor_h) for this grid anchor
    x_ref:       (no, HWc) VMEM      -- channel-major, lane-dense spatial chunk
    o_ref:       (HWc, no) VMEM      -- channels-last output tile (permute fused here)
    stage_ref:   (no, HWc) f32 VMEM  -- lane-dense staging for the fused transpose
    """
    ci = pl.program_id(2)  # hw-chunk index along the flattened spatial axis

    # Spatial offsets along the flattened (lane-dense) grid index i = y*nx + x.
    i = ci * hw_chunk + lax.broadcasted_iota(jnp.int32, (1, hw_chunk), 1)
    if nx & (nx - 1) == 0:                       # power-of-two grid width: cheap bit ops
        gx = (i & (nx - 1)).astype(jnp.float32)
        gy = (i >> (nx.bit_length() - 1)).astype(jnp.float32)
    else:
        gx = (i % nx).astype(jnp.float32)
        gy = (i // nx).astype(jnp.float32)
    goff = jnp.concatenate([gx, gy], axis=0)     # (2, HWc)
    s = jnp.float32(stride)

    # Channels 0:2 -> (sigmoid + grid) * stride.  Ref slices are zero-cost views, so only
    # the two needed rows are live at a time (no whole-tile load, no vreg spills).
    stage_ref[0:2, :] = (jax.nn.sigmoid(x_ref[0:2, :].astype(jnp.float32)) + goff) * s

    # Channels 2:4 -> exp * anchor (w, h); (2,1) anchor tile broadcasts along lanes.
    anc = anchors_ref[...].astype(jnp.float32)   # (2, 1)
    stage_ref[2:4, :] = jnp.exp(x_ref[2:4, :].astype(jnp.float32)) * anc

    # Channels 4: -> sigmoid (objectness + class scores).
    stage_ref[4:, :] = jax.nn.sigmoid(x_ref[4:, :].astype(jnp.float32))

    # Fused output permute: one lane-dense (no, HWc) -> (HWc, no) transpose in VMEM,
    # written channels-last so no extra HBM pass is needed afterwards.
    o_ref[...] = jnp.transpose(stage_ref[...], (1, 0)).astype(o_ref.dtype)


def _round_up(v, m):
    return -(-v // m) * m


def _pick_hw_chunk(hw, target):
    """Largest multiple-of-128 divisor of hw that is <= target; full hw if it is small
    or not 128-divisible (blocks must be (8,128)-aligned or span the full extent)."""
    if hw <= target or hw % 128 != 0:
        return hw
    best = 128
    for cand in range(256, target + 1, 128):
        if hw % cand == 0:
            best = cand
    return best


def yolo_layer_forward(x, anchors, img_size, *, out_dtype=None, hw_chunk_target=2048):
    """x: (bs, na*no, ny, nx) NCHW; anchors: (na, 2) float32. Returns (bs, na*ny*nx, no)."""
    bs, c, ny, nx = x.shape
    na = anchors.shape[0]
    assert c % na == 0, "channel dim must be num_anchors * (num_classes + 5)"
    no = c // na
    stride = img_size // ny                      # same integer division as the PyTorch module
    hw = ny * nx
    out_dtype = jnp.dtype(out_dtype) if out_dtype is not None else x.dtype

    xr = x.reshape(bs, na, no, hw)                        # free contiguous-dim merge
    anc = anchors.astype(jnp.float32).reshape(na, 2, 1)   # tiny VMEM block, lane broadcast

    hw_chunk = _pick_hw_chunk(hw, hw_chunk_target)
    n_chunks = hw // hw_chunk
    grid = (bs, na, n_chunks)                    # all axes independent -> all parallel

    anc_spec = pl.BlockSpec((None, 2, 1), lambda b, a, ci: (a, 0, 0))
    x_spec = pl.BlockSpec((None, None, no, hw_chunk), lambda b, a, ci: (b, a, 0, ci))
    o_spec = pl.BlockSpec((None, None, hw_chunk, no), lambda b, a, ci: (b, a, ci, 0))

    # Explicit VMEM limit: double-buffered in+out blocks + f32 staging scratch + margin.
    in_blk = _round_up(no, 16) * _round_up(hw_chunk, 128) * x.dtype.itemsize
    out_blk = _round_up(hw_chunk, 16) * _round_up(no, 128) * out_dtype.itemsize
    stage_blk = _round_up(no, 8) * _round_up(hw_chunk, 128) * 4
    need = 2 * (in_blk + out_blk) + stage_blk
    vmem_limit = int(min(max(2 * need + (1 << 20), 8 << 20), 48 << 20))

    out = pl.pallas_call(
        functools.partial(_yolo_kernel, stride=float(stride), nx=int(nx),
                          hw_chunk=int(hw_chunk)),
        out_shape=jax.ShapeDtypeStruct((bs, na, hw, no), out_dtype),
        grid_spec=pltpu.PrefetchScalarGridSpec(
            num_scalar_prefetch=0,
            grid=grid,
            in_specs=[anc_spec, x_spec],
            out_specs=o_spec,
            scratch_shapes=[pltpu.VMEM((no, hw_chunk), jnp.float32)],
        ),
        compiler_params=pltpu.CompilerParams(
            dimension_semantics=("parallel", "parallel", "parallel"),
            vmem_limit_bytes=vmem_limit,
        ),
    )(anc, xr)

    # (bs, na, ny*nx, no) -> (bs, na*ny*nx, no): contiguous leading-dim merge, free.
    return out.reshape(bs, na * hw, no)


def yolo_layer_ref(x, anchors, img_size):
    """Pure-JAX reference mirroring the PyTorch forward (inference branch)."""
    bs, c, ny, nx = x.shape
    na = anchors.shape[0]
    no = c // na
    stride = img_size // ny
    v = x.reshape(bs, na, no, ny, nx).transpose(0, 1, 3, 4, 2)  # (bs,na,ny,nx,no)
    yv, xv = jnp.meshgrid(jnp.arange(ny), jnp.arange(nx), indexing="ij")
    grid = jnp.stack((xv, yv), 2).reshape(1, 1, ny, nx, 2).astype(jnp.float32)
    anchor_grid = anchors.reshape(1, na, 1, 1, 2)
    xy = (jax.nn.sigmoid(v[..., 0:2]) + grid) * stride
    wh = jnp.exp(v[..., 2:4]) * anchor_grid
    rest = jax.nn.sigmoid(v[..., 4:])
    return jnp.concatenate([xy, wh, rest], axis=-1).reshape(bs, -1, no)


if __name__ == "__main__":
    # Deterministic setup: 3 anchors, 3 classes -> no = 8 channels per anchor.
    anchors_py = [(10.0, 13.0), (16.0, 30.0), (33.0, 23.0)]
    num_classes = 3
    na = len(anchors_py)
    no = num_classes + 5                               # 8
    anchors = jnp.asarray(anchors_py, dtype=jnp.float32)   # (3, 2)

    bs, ny, nx = 2, 16, 16
    img_size = 128                                     # stride = 128 // 16 = 8

    key = jax.random.PRNGKey(0)
    x = jax.random.normal(key, (bs, na * no, ny, nx), dtype=jnp.float32)

    out = jax.block_until_ready(yolo_layer_forward(x, anchors, img_size))

    ref = yolo_layer_ref(x, anchors, img_size)
    assert out.shape == (bs, na * ny * nx, no), out.shape
    assert jnp.allclose(out, ref, atol=1e-5, rtol=1e-5), "mismatch vs reference"

    # TODO(synk): training-mode branch (pure reshape/permute, no compute) and the
    # nn.MSELoss / nn.BCELoss members are unused in this forward and not kernelized.
    print("KERNEL_OK")
</pallas_src>

<mosaic_0001>
module attributes {stable_mosaic.version = 11 : i64} {
  func.func @_yolo_kernel(%arg0: i32, %arg1: i32, %arg2: i32, %arg3: memref<1x2x1xf32, #tpu.memory_space<vmem>>, %arg4: memref<1x1x8x256xf32, #tpu.memory_space<vmem>>, %arg5: memref<1x1x256x8xf32, #tpu.memory_space<vmem>>, %arg6: memref<8x256xf32, #tpu.memory_space<vmem>>) attributes {dimension_semantics = [#tpu.dimension_semantics<parallel>, #tpu.dimension_semantics<parallel>, #tpu.dimension_semantics<parallel>], iteration_bounds = array<i64: 2, 3, 1>, scalar_prefetch = 0 : i64, scratch_operands = 1 : i64, tpu.core_type = #tpu.core_type<tc>, window_params = [{transform_indices = @transform_0, window_bounds = array<i64: 1, 2, 1>}, {transform_indices = @transform_1, window_bounds = array<i64: 1, 1, 8, 256>}, {transform_indices = @transform_2, window_bounds = array<i64: 1, 1, 256, 8>}]} {
    %c256_i32 = arith.constant 256 : i32
    %0 = arith.muli %arg2, %c256_i32 : i32
    %1 = tpu.iota {dimensions = array<i32: 1>} : vector<1x256xi32>
    %2 = vector.broadcast %0 : i32 to vector<1x256xi32>
    %3 = arith.addi %2, %1 : vector<1x256xi32>
    %c15_i32 = arith.constant 15 : i32
    %4 = vector.broadcast %c15_i32 : i32 to vector<1x256xi32>
    %5 = arith.andi %3, %4 : vector<1x256xi32>
    %6 = arith.sitofp %5 : vector<1x256xi32> to vector<1x256xf32>
    %c4_i32 = arith.constant 4 : i32
    %7 = vector.broadcast %c4_i32 : i32 to vector<1x256xi32>
    %8 = arith.shrsi %3, %7 : vector<1x256xi32>
    %9 = arith.sitofp %8 : vector<1x256xi32> to vector<1x256xf32>
    %10 = tpu.concatenate %6, %9 in 0 : vector<1x256xf32>, vector<1x256xf32> -> vector<2x256xf32>
    %c0 = arith.constant 0 : index
    %c0_0 = arith.constant 0 : index
    %c0_1 = arith.constant 0 : index
    %c0_2 = arith.constant 0 : index
    %11 = vector.load %arg4[%c0, %c0_0, %c0_1, %c0_2] : memref<1x1x8x256xf32, #tpu.memory_space<vmem>>, vector<1x1x2x256xf32>
    %12 = vector.shape_cast %11 : vector<1x1x2x256xf32> to vector<2x256xf32>
    %13 = arith.negf %12 : vector<2x256xf32>
    %14 = math.exp %13 : vector<2x256xf32>
    %cst = arith.constant 1.000000e+00 : f32
    %15 = vector.broadcast %cst : f32 to vector<2x256xf32>
    %16 = arith.addf %15, %14 : vector<2x256xf32>
    %17 = arith.divf %15, %16 : vector<2x256xf32>
    %18 = arith.addf %17, %10 : vector<2x256xf32>
    %cst_3 = arith.constant 8.000000e+00 : f32
    %19 = vector.broadcast %cst_3 : f32 to vector<2x256xf32>
    %20 = arith.mulf %18, %19 : vector<2x256xf32>
    %c0_4 = arith.constant 0 : index
    %c0_5 = arith.constant 0 : index
    %21 = vector.load %arg6[%c0_4, %c0_5] : memref<8x256xf32, #tpu.memory_space<vmem>>, vector<2x256xf32>
    tpu.vector_store %arg6[%c0_4, %c0_5], %20 {strides = array<i32>} : memref<8x256xf32, #tpu.memory_space<vmem>>, vector<2x256xf32>,
    %c0_6 = arith.constant 0 : index
    %c0_7 = arith.constant 0 : index
    %c0_8 = arith.constant 0 : index
    %22 = vector.load %arg3[%c0_6, %c0_7, %c0_8] : memref<1x2x1xf32, #tpu.memory_space<vmem>>, vector<1x2x1xf32>
    %23 = vector.shape_cast %22 : vector<1x2x1xf32> to vector<2x1xf32>
    %c0_9 = arith.constant 0 : index
    %c0_10 = arith.constant 0 : index
    %c2 = arith.constant 2 : index
    %c0_11 = arith.constant 0 : index
    %24 = vector.load %arg4[%c0_9, %c0_10, %c2, %c0_11] : memref<1x1x8x256xf32, #tpu.memory_space<vmem>>, vector<1x1x2x256xf32>
    %25 = vector.shape_cast %24 : vector<1x1x2x256xf32> to vector<2x256xf32>
    %26 = math.exp %25 : vector<2x256xf32>
    %27 = vector.broadcast %23 : vector<2x1xf32> to vector<2x256xf32>
    %28 = arith.mulf %26, %27 : vector<2x256xf32>
    %c2_12 = arith.constant 2 : index
    %c0_13 = arith.constant 0 : index
    %29 = vector.load %arg6[%c2_12, %c0_13] : memref<8x256xf32, #tpu.memory_space<vmem>>, vector<2x256xf32>
    tpu.vector_store %arg6[%c2_12, %c0_13], %28 {strides = array<i32>} : memref<8x256xf32, #tpu.memory_space<vmem>>, vector<2x256xf32>,
    %c0_14 = arith.constant 0 : index
    %c0_15 = arith.constant 0 : index
    %c4 = arith.constant 4 : index
    %c0_16 = arith.constant 0 : index
    %30 = vector.load %arg4[%c0_14, %c0_15, %c4, %c0_16] : memref<1x1x8x256xf32, #tpu.memory_space<vmem>>, vector<1x1x4x256xf32>
    %31 = vector.shape_cast %30 : vector<1x1x4x256xf32> to vector<4x256xf32>
    %32 = arith.negf %31 : vector<4x256xf32>
    %33 = math.exp %32 : vector<4x256xf32>
    %cst_17 = arith.constant 1.000000e+00 : f32
    %34 = vector.broadcast %cst_17 : f32 to vector<4x256xf32>
    %35 = arith.addf %34, %33 : vector<4x256xf32>
    %36 = arith.divf %34, %35 : vector<4x256xf32>
    %c4_18 = arith.constant 4 : index
    %c0_19 = arith.constant 0 : index
    %37 = vector.load %arg6[%c4_18, %c0_19] : memref<8x256xf32, #tpu.memory_space<vmem>>, vector<4x256xf32>
    tpu.vector_store %arg6[%c4_18, %c0_19], %36 {strides = array<i32>} : memref<8x256xf32, #tpu.memory_space<vmem>>, vector<4x256xf32>,
    %c0_20 = arith.constant 0 : index
    %c0_21 = arith.constant 0 : index
    %38 = vector.load %arg6[%c0_20, %c0_21] : memref<8x256xf32, #tpu.memory_space<vmem>>, vector<8x256xf32>
    %39 = tpu.transpose %38, [1, 0] : vector<8x256xf32> -> vector<256x8xf32>
    %c0_22 = arith.constant 0 : index
    %c0_23 = arith.constant 0 : index
    %c0_24 = arith.constant 0 : index
    %c0_25 = arith.constant 0 : index
    %40 = vector.load %arg5[%c0_22, %c0_23, %c0_24, %c0_25] : memref<1x1x256x8xf32, #tpu.memory_space<vmem>>, vector<1x1x256x8xf32>
    %41 = vector.shape_cast %40 : vector<1x1x256x8xf32> to vector<256x8xf32>
    %42 = vector.shape_cast %39 : vector<256x8xf32> to vector<1x1x256x8xf32>
    tpu.vector_store %arg5[%c0_22, %c0_23, %c0_24, %c0_25], %42 {strides = array<i32>} : memref<1x1x256x8xf32, #tpu.memory_space<vmem>>, vector<1x1x256x8xf32>,
    return
  }
  func.func @transform_0(%arg0: i32, %arg1: i32, %arg2: i32) -> (i32, i32, i32) {
    %c0_i32 = arith.constant 0 : i32
    %c0_i32_0 = arith.constant 0 : i32
    %c0_i32_1 = arith.constant 0 : i32
    return %arg1, %c0_i32, %c0_i32_0 : i32, i32, i32
  }
  func.func @transform_1(%arg0: i32, %arg1: i32, %arg2: i32) -> (i32, i32, i32, i32) {
    %c0_i32 = arith.constant 0 : i32
    %c0_i32_0 = arith.constant 0 : i32
    return %arg0, %arg1, %c0_i32, %arg2 : i32, i32, i32, i32
  }
  func.func @transform_2(%arg0: i32, %arg1: i32, %arg2: i32) -> (i32, i32, i32, i32) {
    %c0_i32 = arith.constant 0 : i32
    %c0_i32_0 = arith.constant 0 : i32
    return %arg0, %arg1, %arg2, %c0_i32 : i32, i32, i32, i32
  }
}

</mosaic_0001>

<llo_original>
// kernel: tpu_custom_call.1
$region0: #{tpu_custom_call.1}
  #allocation0 [shape = 'u32[]', space=smem, size = 0x4, offset = 0x4, fixed_abs, tag = 'smem constant byte address 0x4 - core index']
  #allocation1 [shape = 'u32[72,128]{1,0:T(1,128)}', space=vmem, size = 0x9000, scoped, tag = 'internal scratch']
  #allocation2 [shape = 'f32[8,256]{1,0:T(8,128)}', space=vmem, size = 0x2000, scoped, tag = 'scratch operand']
  %s0 = inlined_call_operand.vmem [shape: f32[3,2,1], index: 0, kind: input, shape index: {}]
  %s1 = inlined_call_operand.hbm [shape: f32[2,3,8,256], index: 1, kind: input, shape index: {}]
  %s2 = inlined_call_operand.vmem [shape: f32[2,3,256,8], index: 2, kind: output, shape index: {}]
  %s3 = sld [smem:[#allocation0]]
  $region45: #{tpu_custom_call.1} parent=0
    _
  %s5 = ssub.s32 1, %s3
  %s6 = scalar_select 0, %s5, %s3
  $region1: #{tpu_custom_call.1} parent=0
    #allocation3 [shape = 'u8[16384]{0}', space=vmem, size = 0x4000, scoped, tag = 'input window, operand 1']
    #allocation4 [shape = 's32[2]{0}', space=sflag, size = 0x8, scoped, tag = 'scoped memory for tpu_custom_call.1']
    %7 = vsyncpa [#allocation4], 0
    %s8 = scalar_lea.sflag [#allocation4], 1
    %9 = vsyncpa %s8, 0
    loop: start=0, step=1, limit=8
    $region2: #{tpu_custom_call.1} parent=1 // loop_pre_header
      _
    $region3: #{tpu_custom_call.1} parent=1 // loop_header
      %s11 = sphi 0, %s15
      %p12 = scmp.ge.s32.totalorder %s11, 8
      %s18 = sphi 0, %s37
      %s19 = sphi 0, %s33
      %s20 = sphi 0, %s29
      %s21 = sphi 0, %s18
      %s22 = sphi 0, %s19
      %s23 = sphi 0, %s20
      %s24 = sphi 0, %s21
      %s25 = sphi 0, %s22
      %s26 = sphi 0, %s23
      %s40 = sphi 0, %s42
      %s43 = sphi 0, %s40
      %s44 = sphi 0, %s43
      %s60 = sphi 0, %s44
      %s70 = sphi 0, %s72
      %s73 = sphi 0, %s70
      %s74 = sphi 0, %s73
      %s90 = sphi 0, %s74
      %s100 = sphi 0, %s102
      %s103 = sphi 0, %s100
      %s104 = sphi 0, %s103
      %s120 = sphi 0, %s104
    $region4: #{tpu_custom_call.1} parent=1 // loop_header_branch
      %14 = sbr.rel (%p12) target = $region8
    $region5: #{tpu_custom_call.1} parent=1 // loop_body
      %s16 = ssub.s32 %s11, 1
      %s17 = ssub.s32 %s11, 2
      %s27 = sadd.s32 1, %s20
      %p28 = scmp.ge.s32.totalorder %s27, 1
      %s29 = scalar_select %p28, 0, %s27
      %s30 = sadd.s32 1, %s19
      %s31 = scalar_select %p28, %s30, %s19
      %p32 = scmp.ge.s32.totalorder %s31, 3
      %s33 = scalar_select %p32, 0, %s31
      %s34 = sadd.s32 1, %s18
      %s35 = scalar_select %p32, %s34, %s18
      %p36 = scmp.ge.s32.totalorder %s35, 2
      %s37 = scalar_select %p36, 0, %s35
      %s38 = ssub.s32 %s19, %s33
      %p39 = scmp.eq.s32.totalorder %s38, 0
      %s41 = sadd.s32 %s40, 1
      %s42 = scalar_select %p39, %s40, %s41
      %p45 = pneg %p39
      %p46 = scmp.eq.s32.totalorder %s11, 5
      %p47 = por %p45, %p46
      %p48 = scmp.ne.s32.totalorder %s40, %s43
      %p49 = scmp.eq.s32.totalorder %s11, 0
      %p50 = por %p48, %p49
      %p51 = scmp.ne.s32.totalorder %s40, %s43
      %p52 = scmp.eq.s32.totalorder %s16, 5
      %p53 = por %p51, %p52
      %p54 = scmp.ne.s32.totalorder %s43, %s44
      %p55 = scmp.eq.s32.totalorder %s16, 0
      %p56 = por %p54, %p55
      %p57 = scmp.ne.s32.totalorder %s43, %s44
      %p58 = scmp.eq.s32.totalorder %s17, 5
      %p59 = por %p57, %p58
      %p61 = scmp.ne.s32.totalorder %s44, %s60
      %p62 = scmp.eq.s32.totalorder %s17, 0
      %p63 = por %p61, %p62
      %s64 = ssub.s32 %s18, %s37
      %s65 = ssub.s32 %s19, %s33
      %s66 = sor.u32 %s64, %s65
      %s67 = ssub.s32 %s20, %s29
      %s68 = sor.u32 %s66, %s67
      %p69 = scmp.eq.s32.totalorder %s68, 0
      %s71 = sadd.s32 %s70, 1
      %s72 = scalar_select %p69, %s70, %s71
      %p75 = pneg %p69
      %p76 = scmp.eq.s32.totalorder %s11, 5
      %p77 = por %p75, %p76
      %p78 = scmp.ne.s32.totalorder %s70, %s73
      %p79 = scmp.eq.s32.totalorder %s11, 0
      %p80 = por %p78, %p79
      %p81 = scmp.ne.s32.totalorder %s70, %s73
      %p82 = scmp.eq.s32.totalorder %s16, 5
      %p83 = por %p81, %p82
      %p84 = scmp.ne.s32.totalorder %s73, %s74
      %p85 = scmp.eq.s32.totalorder %s16, 0
      %p86 = por %p84, %p85
      %p87 = scmp.ne.s32.totalorder %s73, %s74
      %p88 = scmp.eq.s32.totalorder %s17, 5
      %p89 = por %p87, %p88
      %p91 = scmp.ne.s32.totalorder %s74, %s90
      %p92 = scmp.eq.s32.totalorder %s17, 0
      %p93 = por %p91, %p92
      %s94 = ssub.s32 %s18, %s37
      %s95 = ssub.s32 %s19, %s33
      %s96 = sor.u32 %s94, %s95
      %s97 = ssub.s32 %s20, %s29
      %s98 = sor.u32 %s96, %s97
      %p99 = scmp.eq.s32.totalorder %s98, 0
      %s101 = sadd.s32 %s100, 1
      %s102 = scalar_select %p99, %s100, %s101
      %p105 = pneg %p99
      %p106 = scmp.eq.s32.totalorder %s11, 5
      %p107 = por %p105, %p106
      %p108 = scmp.ne.s32.totalorder %s100, %s103
      %p109 = scmp.eq.s32.totalorder %s11, 0
      %p110 = por %p108, %p109
      %p111 = scmp.ne.s32.totalorder %s100, %s103
      %p112 = scmp.eq.s32.totalorder %s16, 5
      %p113 = por %p111, %p112
      %p114 = scmp.ne.s32.totalorder %s103, %s104
      %p115 = scmp.eq.s32.totalorder %s16, 0
      %p116 = por %p114, %p115
      %p117 = scmp.ne.s32.totalorder %s103, %s104
      %p118 = scmp.eq.s32.totalorder %s17, 5
      %p119 = por %p117, %p118
      %p121 = scmp.ne.s32.totalorder %s104, %s120
      %p122 = scmp.eq.s32.totalorder %s17, 0
      %p123 = por %p121, %p122
      %p124 = scmp.le.s32.totalorder 1, %s11
      %p125 = scmp.lt.s32.totalorder %s11, 7
      %p126 = pnand %p124, %p125
      %p127 = pneg %p126
      // Predicated region
      $region9: #{tpu_custom_call.1} parent=5 // pred_check
        _
      $region10: #{tpu_custom_call.1} parent=5 // pred_check_branch
        %129 = sbr.rel (%p126) target = $region12
      $region11: #{tpu_custom_call.1} parent=5 // pred_region
        %s130 = ssub.s32 %s11, 1
      $region12: #{tpu_custom_call.1} parent=5 // pred_fallthru
        _
      %p131 = scmp.lt.s32.totalorder %s11, 6
      // Predicated region
      $region13: #{tpu_custom_call.1} parent=5 // pred_check
        %p132 = pneg %p131
      $region14: #{tpu_custom_call.1} parent=5 // pred_check_branch
        %134 = sbr.rel (%p132) target = $region16
      $region15: #{tpu_custom_call.1} parent=5 // pred_region
        // Predicated region
        $region17: #{tpu_custom_call.1} parent=15 // pred_check
          %p135 = pneg %p50
        $region18: #{tpu_custom_call.1} parent=15 // pred_check_branch
          %137 = sbr.rel (%p135) target = $region20
        $region19: #{tpu_custom_call.1} parent=15 // pred_region
          %p138 = scmp.lt.s32.totalorder %s19, 2
          %s139 = scalar_select %p138, %s19, 2
          %s140 = smul.addr %s139, 2
          %s141 = scalar_lea.vmem %s0, %s140
        $region20: #{tpu_custom_call.1} parent=15 // pred_fallthru
          _
        // Predicated region
        $region21: #{tpu_custom_call.1} parent=15 // pred_check
          %p142 = pneg %p80
        $region22: #{tpu_custom_call.1} parent=15 // pred_check_branch
          %144 = sbr.rel (%p142) target = $region24
        $region23: #{tpu_custom_call.1} parent=15 // pred_region
          %s145 = sand.u32 %s70, 1
          %s146 = scalar_lea.sflag [#allocation4], %s145
          %s147 = sand.u32 %s70, 1
          %s148 = smul.addr %s147, 16
          %s149 = scalar_lea.vmem [#allocation3], %s148
          %s150 = smul.u32 2, %s20
          %152 = vsyncadd %s146, 0
          %s153 = smul.addr %s19, 2
          %s154 = sadd.s32 %s150, %s153
          %s155 = smul.addr %s18, 6
          %s156 = sadd.s32 %s154, %s155
          %s157 = smul.addr %s156, 8
          %s158 = scalar_lea.hbm %s1, %s157
          %s160 = sshll.u32 %s158, 4
          %s161 = int_to_ptr.hbm [resolvable:$true] %s160
          %s162 = sshll.u32 %s149, 4
          %s163 = int_to_ptr.vmem [resolvable:$true] %s162
          %165 = dma.hbm_to_vmem [thread:$0]  %s161, 256, %s163, %s146
        $region24: #{tpu_custom_call.1} parent=15 // pred_fallthru
          _
      $region16: #{tpu_custom_call.1} parent=5 // pred_fallthru
        _
      %p166 = scmp.le.s32.totalorder 1, %s11
      %p167 = scmp.lt.s32.totalorder %s11, 7
      %p168 = pnand %p166, %p167
      %p169 = pneg %p168
      // Predicated region
      $region25: #{tpu_custom_call.1} parent=5 // pred_check
        _
      $region26: #{tpu_custom_call.1} parent=5 // pred_check_branch
        %171 = sbr.rel (%p168) target = $region28
      $region27: #{tpu_custom_call.1} parent=5 // pred_region
        %s172 = ssub.s32 %s11, 1
        %s173 = sand.u32 %s73, 1
        %s174 = scalar_lea.sflag [#allocation4], %s173
        %s175 = sand.u32 %s73, 1
        %s176 = smul.addr %s175, 16
        %s177 = scalar_lea.vmem [#allocation3], %s176
        // Predicated region
        $region29: #{tpu_custom_call.1} parent=27 // pred_check
          %p178 = pneg %p86
        $region30: #{tpu_custom_call.1} parent=27 // pred_check_branch
          %180 = sbr.rel (%p178) target = $region32
        $region31: #{tpu_custom_call.1} parent=27 // pred_region
          %182 = dma.done %s174, 256
        $region32: #{tpu_custom_call.1} parent=27 // pred_fallthru
          _
        %p183 = scmp.lt.s32.totalorder %s22, 2
        %s184 = scalar_select %p183, %s22, 2
        %s185 = smul.addr %s184, 2
        %s186 = scalar_lea.vmem %s0, %s185
        %p187 = pneg %p56
        %p188 = pneg %p53
        %s189 = sand.u32 %s73, 1
        %s190 = scalar_lea.sflag [#allocation4], %s189
        %s191 = sand.u32 %s73, 1
        %s192 = smul.addr %s191, 16
        %s193 = scalar_lea.vmem [#allocation3], %s192
        %p194 = pneg %p86
        %p195 = pneg %p83
        %p196 = pneg %p116
        %p197 = pneg %p113
        %s198 = smul.u32 32, %s23
        %p199 = scmp.lt.s32.totalorder %s21, 1
        %s200 = scalar_select %p199, %s21, 1
        %p201 = scmp.lt.s32.totalorder %s22, 2
        %s202 = scalar_select %p201, %s22, 2
        %p203 = scmp.lt.s32.totalorder %s198, 31
        %s204 = scalar_select %p203, %s198, 31
        %s205 = smul.addr %s202, 32
        %s206 = sadd.s32 %s204, %s205
        %s207 = smul.addr %s200, 96
        %s208 = sadd.s32 %s206, %s207
        %s209 = smul.addr %s208, 8
        %s210 = scalar_lea.vmem %s2, %s209
        %p211 = scmp.lt.s32.totalorder %s22, 2
        %s212 = scalar_select %p211, %s22, 2
        %s213 = smul.addr %s212, 2
        %s214 = scalar_lea.vmem %s0, %s213
        %s215 = smul.u32 2, %s23
        %s216 = smul.u32 32, %s23
        %p217 = scmp.lt.s32.totalorder %s21, 1
        %s218 = scalar_select %p217, %s21, 1
        %p219 = scmp.lt.s32.totalorder %s22, 2
        %s220 = scalar_select %p219, %s22, 2
        %p221 = scmp.lt.s32.totalorder %s216, 31
        %s222 = scalar_select %p221, %s216, 31
        %s223 = smul.addr %s220, 32
        %s224 = sadd.s32 %s222, %s223
        %s225 = smul.addr %s218, 96
        %s226 = sadd.s32 %s224, %s225
        %s227 = smul.addr %s226, 8
        %s228 = scalar_lea.vmem %s2, %s227
        %s229 = smul.u32 32, %s23
        %s230 = smul.u32 %s23, 256
        %v231 = vlaneseq
        %v232 = vand.u32 %v231, 127
        %v233 = vadd.s32 %v232, 128
        %v234 = vstv %s230
        %v235 = vadd.s32 %v234, %v232
        %v236 = vadd.s32 %v234, %v233
        %v237 = vand.u32 %v235, 15
        %v238 = vand.u32 %v236, 15
        %v239 = vcvt.s32.f32 %v237
        %v240 = vcvt.s32.f32 %v238
        %v241 = vshra.s32 %v235, 4
        %v242 = vshra.s32 %v236, 4
        %v243 = vcvt.s32.f32 %v241
        %v244 = vcvt.s32.f32 %v242
        %vm245 = vcmask 1040384
        %v246 = vsel %vm245, %v239, %v243
        %v247 = vsel %vm245, %v240, %v244
        %v248 = vld [vmem:[%s177] sm:$0x3]
        %v249 = vld [vmem:[%s177 + $0x8] sm:$0x3]
        %v250 = vxor.u32 %v248, 2147483648
        %v251 = vxor.u32 %v249, 2147483648
        %v252 = vmul.f32 %v250, 1.442695
        %v253 = vpow.pop %v252
        %v254 = vmul.f32 %v251, 1.442695
        %v255 = vpow.pop %v254
        %v256 = vadd.f32 %v253, 1.0
        %v257 = vadd.f32 %v255, 1.0
        %v258 = vrcp.pop %v256
        %v259 = vmul.f32 %v256, %v258
        %v260 = vsub.f32 1.0, %v259
        %v261 = vmul.f32 %v258, %v260
        %v262 = vadd.f32 %v258, %v261
        %vm263 = vweird.f32 %v256
        %vm264 = vweird.f32 %v258
        %vm265 = vmor %vm263, %vm264
        %v266 = vsel %vm265, %v258, %v262
        %v267 = vand.u32 2147483647, %v256
        %vm268 = vcmp.eq.f32.partialorder %v267, 8.507059e+37
        %v269 = vand.u32 %v256, 2147483648
        %v270 = vor.u32 1.1754944e-38, %v269
        %v271 = vsel %vm268, %v270, %v266
        %v272 = vmul.f32 1.0, %v271
        %v273 = vrcp.pop %v257
        %v274 = vmul.f32 %v257, %v273
        %v275 = vsub.f32 1.0, %v274
        %v276 = vmul.f32 %v273, %v275
        %v277 = vadd.f32 %v273, %v276
        %vm278 = vweird.f32 %v257
        %vm279 = vweird.f32 %v273
        %vm280 = vmor %vm278, %vm279
        %v281 = vsel %vm280, %v273, %v277
        %v282 = vand.u32 2147483647, %v257
        %vm283 = vcmp.eq.f32.partialorder %v282, 8.507059e+37
        %v284 = vand.u32 %v257, 2147483648
        %v285 = vor.u32 1.1754944e-38, %v284
        %v286 = vsel %vm283, %v285, %v281
        %v287 = vmul.f32 1.0, %v286
        %v288 = vadd.f32 %v272, %v246
        %v289 = vadd.f32 %v287, %v247
        %v290 = vmul.f32 %v288, 8.0
        %v291 = vmul.f32 %v289, 8.0
        %292 = vst [vmem:[#allocation2] sm:$0x3] %v290
        %293 = vst [vmem:[#allocation2 + $0x8] sm:$0x3] %v291
        %v294 = vld [vmem:[%s214] sm:$0x3]
        %v295 = vld [vmem:[%s177] sm:$0xc]
        %v296 = vld [vmem:[%s177 + $0x8] sm:$0xc]
        %v297 = vmul.f32 %v295, 1.442695
        %v298 = vpow.pop %v297
        %v299 = vmul.f32 %v296, 1.442695
        %v300 = vpow.pop %v299
        %302 = vset.pattern.permute.xlu0 0
        %303 = vperm.xlu0 %302, %v294
        %v304 = vpop.permute.xlu0 %303
        %v305 = vrot.slane %v304, 6
        %v307 = vmul.f32 %v298, %v305
        %v308 = vmul.f32 %v300, %v305
        %309 = vst [vmem:[#allocation2] sm:$0xc] %v307
        %310 = vst [vmem:[#allocation2 + $0x8] sm:$0xc] %v308
        %v311 = vld [vmem:[%s177] sm:$0xf0]
        %v312 = vld [vmem:[%s177 + $0x8] sm:$0xf0]
        %v313 = vxor.u32 %v311, 2147483648
        %v314 = vxor.u32 %v312, 2147483648
        %v315 = vmul.f32 %v313, 1.442695
        %v316 = vpow.pop %v315
        %v317 = vmul.f32 %v314, 1.442695
        %v318 = vpow.pop %v317
        %v319 = vadd.f32 %v316, 1.0
        %v320 = vadd.f32 %v318, 1.0
        %v321 = vrcp.pop %v319
        %v322 = vmul.f32 %v319, %v321
        %v323 = vsub.f32 1.0, %v322
        %v324 = vmul.f32 %v321, %v323
        %v325 = vadd.f32 %v321, %v324
        %vm326 = vweird.f32 %v319
        %vm327 = vweird.f32 %v321
        %vm328 = vmor %vm326, %vm327
        %v329 = vsel %vm328, %v321, %v325
        %v330 = vand.u32 2147483647, %v319
        %vm331 = vcmp.eq.f32.partialorder %v330, 8.507059e+37
        %v332 = vand.u32 %v319, 2147483648
        %v333 = vor.u32 1.1754944e-38, %v332
        %v334 = vsel %vm331, %v333, %v329
        %v335 = vmul.f32 1.0, %v334
        %v336 = vrcp.pop %v320
        %v337 = vmul.f32 %v320, %v336
        %v338 = vsub.f32 1.0, %v337
        %v339 = vmul.f32 %v336, %v338
        %v340 = vadd.f32 %v336, %v339
        %vm341 = vweird.f32 %v320
        %vm342 = vweird.f32 %v336
        %vm343 = vmor %vm341, %vm342
        %v344 = vsel %vm343, %v336, %v340
        %v345 = vand.u32 2147483647, %v320
        %vm346 = vcmp.eq.f32.partialorder %v345, 8.507059e+37
        %v347 = vand.u32 %v320, 2147483648
        %v348 = vor.u32 1.1754944e-38, %v347
        %v349 = vsel %vm346, %v348, %v344
        %v350 = vmul.f32 1.0, %v349
        %351 = vst [vmem:[#allocation2] sm:$0xf0] %v335
        %352 = vst [vmem:[#allocation2 + $0x8] sm:$0xf0] %v350
        %v353 = vld [vmem:[#allocation2] sm:$0xff]
        %v354 = vld [vmem:[#allocation2 + $0x8] sm:$0xff]
        %355 = vxpose.xlu0.b32.start [1/16] %v353, 128
        %356 = vxpose.xlu0.b32.cont [2/16] 0.0, 128
        %357 = vxpose.xlu0.b32.cont [3/16] 0.0, 128
        %358 = vxpose.xlu0.b32.cont [4/16] 0.0, 128
        %359 = vxpose.xlu0.b32.cont [5/16] 0.0, 128
        %360 = vxpose.xlu0.b32.cont [6/16] 0.0, 128
        %361 = vxpose.xlu0.b32.cont [7/16] 0.0, 128
        %362 = vxpose.xlu0.b32.cont [8/16] 0.0, 128
        %363 = vxpose.xlu0.b32.cont [9/16] 0.0, 128
        %364 = vxpose.xlu0.b32.cont [10/16] 0.0, 128
        %365 = vxpose.xlu0.b32.cont [11/16] 0.0, 128
        %366 = vxpose.xlu0.b32.cont [12/16] 0.0, 128
        %367 = vxpose.xlu0.b32.cont [13/16] 0.0, 128
        %368 = vxpose.xlu0.b32.cont [14/16] 0.0, 128
        %369 = vxpose.xlu0.b32.cont [15/16] 0.0, 128
        %370 = vxpose.xlu0.b32.end [16/16] 0.0, 128
        %v371 = vpop.trf.xlu0
        %v372 = vpop.trf.xlu0
        %v373 = vpop.trf.xlu0
        %v374 = vpop.trf.xlu0
        %v375 = vpop.trf.xlu0
        %v376 = vpop.trf.xlu0
        %v377 = vpop.trf.xlu0
        %v378 = vpop.trf.xlu0
        %v379 = vpop.trf.xlu0
        %v380 = vpop.trf.xlu0
        %v381 = vpop.trf.xlu0
        %v382 = vpop.trf.xlu0
        %v383 = vpop.trf.xlu0
        %v384 = vpop.trf.xlu0
        %v385 = vpop.trf.xlu0
        %v386 = vpop.trf.xlu0
        %387 = vxpose.xlu0.b32.start [1/16] %v354, 128
        %388 = vxpose.xlu0.b32.cont [2/16] 0.0, 128
        %389 = vxpose.xlu0.b32.cont [3/16] 0.0, 128
        %390 = vxpose.xlu0.b32.cont [4/16] 0.0, 128
        %391 = vxpose.xlu0.b32.cont [5/16] 0.0, 128
        %392 = vxpose.xlu0.b32.cont [6/16] 0.0, 128
        %393 = vxpose.xlu0.b32.cont [7/16] 0.0, 128
        %394 = vxpose.xlu0.b32.cont [8/16] 0.0, 128
        %395 = vxpose.xlu0.b32.cont [9/16] 0.0, 128
        %396 = vxpose.xlu0.b32.cont [10/16] 0.0, 128
        %397 = vxpose.xlu0.b32.cont [11/16] 0.0, 128
        %398 = vxpose.xlu0.b32.cont [12/16] 0.0, 128
        %399 = vxpose.xlu0.b32.cont [13/16] 0.0, 128
        %400 = vxpose.xlu0.b32.cont [14/16] 0.0, 128
        %401 = vxpose.xlu0.b32.cont [15/16] 0.0, 128
        %402 = vxpose.xlu0.b32.end [16/16] 0.0, 128
        %v403 = vpop.trf.xlu0
        %v404 = vpop.trf.xlu0
        %v405 = vpop.trf.xlu0
        %v406 = vpop.trf.xlu0
        %v407 = vpop.trf.xlu0
        %v408 = vpop.trf.xlu0
        %v409 = vpop.trf.xlu0
        %v410 = vpop.trf.xlu0
        %v411 = vpop.trf.xlu0
        %v412 = vpop.trf.xlu0
        %v413 = vpop.trf.xlu0
        %v414 = vpop.trf.xlu0
        %v415 = vpop.trf.xlu0
        %v416 = vpop.trf.xlu0
        %v417 = vpop.trf.xlu0
        %v418 = vpop.trf.xlu0
        %vm419 = vcmask 64512
        %420 = vst.msk [vmem:[%s228] sm:$0xff] %vm419, %v371
        %421 = vst.msk [vmem:[%s228 + $0x8] sm:$0xff] %vm419, %v372
        %422 = vst.msk [vmem:[%s228 + $0x10] sm:$0xff] %vm419, %v373
        %423 = vst.msk [vmem:[%s228 + $0x18] sm:$0xff] %vm419, %v374
        %424 = vst.msk [vmem:[%s228 + $0x20] sm:$0xff] %vm419, %v375
        %425 = vst.msk [vmem:[%s228 + $0x28] sm:$0xff] %vm419, %v376
        %426 = vst.msk [vmem:[%s228 + $0x30] sm:$0xff] %vm419, %v377
        %427 = vst.msk [vmem:[%s228 + $0x38] sm:$0xff] %vm419, %v378
        %428 = vst.msk [vmem:[%s228 + $0x40] sm:$0xff] %vm419, %v379
        %429 = vst.msk [vmem:[%s228 + $0x48] sm:$0xff] %vm419, %v380
        %430 = vst.msk [vmem:[%s228 + $0x50] sm:$0xff] %vm419, %v381
        %431 = vst.msk [vmem:[%s228 + $0x58] sm:$0xff] %vm419, %v382
        %432 = vst.msk [vmem:[%s228 + $0x60] sm:$0xff] %vm419, %v383
        %433 = vst.msk [vmem:[%s228 + $0x68] sm:$0xff] %vm419, %v384
        %434 = vst.msk [vmem:[%s228 + $0x70] sm:$0xff] %vm419, %v385
        %435 = vst.msk [vmem:[%s228 + $0x78] sm:$0xff] %vm419, %v386
        %436 = vst.msk [vmem:[%s228 + $0x80] sm:$0xff] %vm419, %v403
        %437 = vst.msk [vmem:[%s228 + $0x88] sm:$0xff] %vm419, %v404
        %438 = vst.msk [vmem:[%s228 + $0x90] sm:$0xff] %vm419, %v405
        %439 = vst.msk [vmem:[%s228 + $0x98] sm:$0xff] %vm419, %v406
        %440 = vst.msk [vmem:[%s228 + $0xa0] sm:$0xff] %vm419, %v407
        %441 = vst.msk [vmem:[%s228 + $0xa8] sm:$0xff] %vm419, %v408
        %442 = vst.msk [vmem:[%s228 + $0xb0] sm:$0xff] %vm419, %v409
        %443 = vst.msk [vmem:[%s228 + $0xb8] sm:$0xff] %vm419, %v410
        %444 = vst.msk [vmem:[%s228 + $0xc0] sm:$0xff] %vm419, %v411
        %445 = vst.msk [vmem:[%s228 + $0xc8] sm:$0xff] %vm419, %v412
        %446 = vst.msk [vmem:[%s228 + $0xd0] sm:$0xff] %vm419, %v413
        %447 = vst.msk [vmem:[%s228 + $0xd8] sm:$0xff] %vm419, %v414
        %448 = vst.msk [vmem:[%s228 + $0xe0] sm:$0xff] %vm419, %v415
        %449 = vst.msk [vmem:[%s228 + $0xe8] sm:$0xff] %vm419, %v416
        %450 = vst.msk [vmem:[%s228 + $0xf0] sm:$0xff] %vm419, %v417
        %451 = vst.msk [vmem:[%s228 + $0xf8] sm:$0xff] %vm419, %v418
        %s452 = smul.u32 32, %s23
        %p453 = scmp.lt.s32.totalorder %s21, 1
        %s454 = scalar_select %p453, %s21, 1
        %p455 = scmp.lt.s32.totalorder %s22, 2
        %s456 = scalar_select %p455, %s22, 2
        %p457 = scmp.lt.s32.totalorder %s452, 31
        %s458 = scalar_select %p457, %s452, 31
        %s459 = smul.addr %s456, 32
        %s460 = sadd.s32 %s458, %s459
        %s461 = smul.addr %s454, 96
        %s462 = sadd.s32 %s460, %s461
        %s463 = smul.addr %s462, 8
        %s464 = scalar_lea.vmem %s2, %s463
        // Predicated region
        $region33: #{tpu_custom_call.1} parent=27 // pred_check
          %p465 = pneg %p113
        $region34: #{tpu_custom_call.1} parent=27 // pred_check_branch
          %467 = sbr.rel (%p465) target = $region36
        $region35: #{tpu_custom_call.1} parent=27 // pred_region
          %s468 = smul.u32 32, %s23
        $region36: #{tpu_custom_call.1} parent=27 // pred_fallthru
          _
      $region28: #{tpu_custom_call.1} parent=5 // pred_fallthru
        _
      %p469 = scmp.le.s32.totalorder 2, %s11
      // Predicated region
      $region37: #{tpu_custom_call.1} parent=5 // pred_check
        %p470 = pneg %p469
      $region38: #{tpu_custom_call.1} parent=5 // pred_check_branch
        %472 = sbr.rel (%p470) target = $region40
      $region39: #{tpu_custom_call.1} parent=5 // pred_region
        %s473 = ssub.s32 %s11, 2
        // Predicated region
        $region41: #{tpu_custom_call.1} parent=39 // pred_check
          %p474 = pneg %p119
        $region42: #{tpu_custom_call.1} parent=39 // pred_check_branch
          %476 = sbr.rel (%p474) target = $region44
        $region43: #{tpu_custom_call.1} parent=39 // pred_region
          %s477 = smul.u32 32, %s26
          %p478 = scmp.lt.s32.totalorder %s24, 1
          %s479 = scalar_select %p478, %s24, 1
          %p480 = scmp.lt.s32.totalorder %s25, 2
          %s481 = scalar_select %p480, %s25, 2
          %p482 = scmp.lt.s32.totalorder %s477, 31
          %s483 = scalar_select %p482, %s477, 31
          %s484 = smul.addr %s481, 32
          %s485 = sadd.s32 %s483, %s484
          %s486 = smul.addr %s479, 96
          %s487 = sadd.s32 %s485, %s486
          %s488 = smul.addr %s487, 8
          %s489 = scalar_lea.vmem %s2, %s488
        $region44: #{tpu_custom_call.1} parent=39 // pred_fallthru
          _
      $region40: #{tpu_custom_call.1} parent=5 // pred_fallthru
        _
    $region6: #{tpu_custom_call.1} parent=1 // loop_footer
      %s15 = sadd.s32 1, %s11
    $region7: #{tpu_custom_call.1} parent=1 // loop_footer_branch
      %10 = sbr.rel target = $region3
    $region8: #{tpu_custom_call.1} parent=1 // loop_exit
      _
    %490 = vsyncpa [#allocation4], 1
    %s491 = scalar_lea.sflag [#allocation4], 1
    %492 = vsyncpa %s491, 1

</llo_original>
